<compile_context>
chip_gen: v5e
topology: v5e:2x2
jax: 0.10.0
libtpu: 0.0.40
codegen_flags: <defaults>
</compile_context>

<pallas_src>
import functools

import jax
import jax.numpy as jnp
from jax.experimental import pallas as pl
from jax.experimental.pallas import tpu as pltpu


def _text_mlp_kernel(q_ref, wt1_ref, bt1_ref, wt2_ref, bt2_ref, out_ref):
    """Full-batch two-layer ReLU MLP for the question embedding: (B, Dtxt) -> (B, H)."""
    h = jnp.dot(q_ref[...], wt1_ref[...],
                preferred_element_type=jnp.float32) + bt1_ref[...]
    h = jnp.maximum(h, 0.0)
    h = jnp.dot(h, wt2_ref[...],
                preferred_element_type=jnp.float32) + bt2_ref[...]
    out_ref[...] = jnp.maximum(h, 0.0).astype(out_ref.dtype)


def _image_fuse_kernel(img_ref, qfa_ref, wi1_ref, bi1_ref, wi2_ref, bi2_ref,
                       out_ref):
    """Image two-layer ReLU MLP + broadcast multiply with precomputed question_fa.

    Block shapes:
      img_ref : (TB, L, Dimg)   qfa_ref : (TB, 1, H)
      wi1_ref : (Dimg, H)       wi2_ref : (H, H)      biases : (1, H)
      out_ref : (TB, L, H)
    """
    tb, num_loc, dimg = img_ref.shape
    hidden = wi1_ref.shape[1]

    # Flatten (TB, L) -> TB*L rows so one MXU matmul covers the whole block.
    x = img_ref[...].reshape(tb * num_loc, dimg)

    h = jnp.dot(x, wi1_ref[...],
                preferred_element_type=jnp.float32) + bi1_ref[...]
    h = jnp.maximum(h, 0.0)
    h = jnp.dot(h, wi2_ref[...],
                preferred_element_type=jnp.float32) + bi2_ref[...]
    h = jnp.maximum(h, 0.0)                                   # (TB*L, H)

    joint = h.reshape(tb, num_loc, hidden) * qfa_ref[...]     # (TB, L, H)*(TB, 1, H)
    # Dropout: identity in eval mode.
    out_ref[...] = joint.astype(out_ref.dtype)


def _largest_divisor_leq(n, cap):
    for d in range(min(n, cap), 0, -1):
        if n % d == 0:
            return d
    return 1


def two_layer_element_multiply(image_feat, question_embedding,
                               Wi1, bi1, Wi2, bi2, Wt1, bt1, Wt2, bt2,
                               *, block_b=None):
    """Forward of TwoLayerElementMultiply.

    image_feat: (B, L, Dimg) or (B, Dimg); question_embedding: (B, Dtxt).
    """
    squeeze_loc = False
    if image_feat.ndim == 2:               # module's 2-D branch: no location axis
        image_feat = image_feat[:, None, :]
        squeeze_loc = True

    B, L, Dimg = image_feat.shape
    H = Wi1.shape[1]

    # --- Question path: one Pallas call over the full batch (M = B matmul rows). ---
    question_fa = pl.pallas_call(
        _text_mlp_kernel,
        out_shape=jax.ShapeDtypeStruct((B, H), jnp.float32),
    )(question_embedding, Wt1, bt1, Wt2, bt2)
    question_fa = question_fa.reshape(B, 1, H)   # per-sample row, lane-dense H

    # --- Image path + elementwise fusion: grid over blocks of TB samples. ---
    if block_b is None:
        block_b = _largest_divisor_leq(B, 8)
    TB = block_b
    if B % TB != 0:
        raise ValueError(f"batch {B} must be divisible by block_b {TB}")

    grid_spec = pltpu.PrefetchScalarGridSpec(
        num_scalar_prefetch=0,
        grid=(B // TB,),
        in_specs=[
            pl.BlockSpec((TB, L, Dimg), lambda b: (b, 0, 0)),
            pl.BlockSpec((TB, 1, H), lambda b: (b, 0, 0)),
            # Weight / bias blocks are grid-invariant -> DMA'd once, then reused.
            pl.BlockSpec((Dimg, H), lambda b: (0, 0)),
            pl.BlockSpec((1, H), lambda b: (0, 0)),
            pl.BlockSpec((H, H), lambda b: (0, 0)),
            pl.BlockSpec((1, H), lambda b: (0, 0)),
        ],
        out_specs=pl.BlockSpec((TB, L, H), lambda b: (b, 0, 0)),
    )

    out = pl.pallas_call(
        _image_fuse_kernel,
        out_shape=jax.ShapeDtypeStruct((B, L, H), jnp.float32),
        grid_spec=grid_spec,
        compiler_params=pltpu.CompilerParams(
            dimension_semantics=("parallel",)),
    )(image_feat, question_fa, Wi1, bi1, Wi2, bi2)

    if squeeze_loc:
        out = out[:, 0, :]
    return out


def reference(image_feat, question_embedding, Wi1, bi1, Wi2, bi2,
              Wt1, bt1, Wt2, bt2):
    """Pure-JAX mirror of TwoLayerElementMultiply.forward (eval mode)."""
    image_fa = jax.nn.relu(jax.nn.relu(image_feat @ Wi1 + bi1) @ Wi2 + bi2)
    question_fa = jax.nn.relu(
        jax.nn.relu(question_embedding @ Wt1 + bt1) @ Wt2 + bt2)
    if image_feat.ndim == 3:
        question_fa = question_fa[:, None, :]
    return image_fa * question_fa


if __name__ == "__main__":
    # Small shapes consistent with the module; H lane-aligned (128), L a multiple
    # of 8, B/TB chosen so the batch-block grid has 2 even parallel steps.
    B, L = 4, 16
    img_feat_dim, ques_emb_dim = 64, 48
    hidden_dim = 128
    TB = 2

    key = jax.random.PRNGKey(0)
    ks = jax.random.split(key, 10)
    image_feat = jax.random.normal(ks[0], (B, L, img_feat_dim), jnp.float32)
    question = jax.random.normal(ks[1], (B, ques_emb_dim), jnp.float32)

    Wi1 = jax.random.normal(ks[2], (img_feat_dim, hidden_dim), jnp.float32) * 0.1
    bi1 = jax.random.normal(ks[3], (1, hidden_dim), jnp.float32) * 0.1
    Wi2 = jax.random.normal(ks[4], (hidden_dim, hidden_dim), jnp.float32) * 0.1
    bi2 = jax.random.normal(ks[5], (1, hidden_dim), jnp.float32) * 0.1
    Wt1 = jax.random.normal(ks[6], (ques_emb_dim, hidden_dim), jnp.float32) * 0.1
    bt1 = jax.random.normal(ks[7], (1, hidden_dim), jnp.float32) * 0.1
    Wt2 = jax.random.normal(ks[8], (hidden_dim, hidden_dim), jnp.float32) * 0.1
    bt2 = jax.random.normal(ks[9], (1, hidden_dim), jnp.float32) * 0.1

    # jit the wrapper so the two pallas_calls + the cheap reshape dispatch as one
    # XLA program (no host round-trip between the text and image kernels).
    fwd = jax.jit(functools.partial(two_layer_element_multiply, block_b=TB))

    out = fwd(image_feat, question,
              Wi1, bi1, Wi2, bi2, Wt1, bt1, Wt2, bt2)
    out = jax.block_until_ready(out)

    ref = reference(image_feat, question, Wi1, bi1, Wi2, bi2,
                    Wt1, bt1, Wt2, bt2)

    assert out.shape == (B, L, hidden_dim)
    assert jnp.allclose(out, ref, atol=1e-4, rtol=1e-4), "mismatch vs reference"
    # TODO(synk): training-mode dropout masking (p>0) is not implemented; eval-mode identity only.
    print("KERNEL_OK")
</pallas_src>

<mosaic_0001>
module attributes {stable_mosaic.version = 11 : i64} {
  func.func @_image_fuse_kernel(%arg0: i32, %arg1: memref<2x16x64xf32, #tpu.memory_space<vmem>>, %arg2: memref<2x1x128xf32, #tpu.memory_space<vmem>>, %arg3: memref<64x128xf32, #tpu.memory_space<vmem>>, %arg4: memref<1x128xf32, #tpu.memory_space<vmem>>, %arg5: memref<128x128xf32, #tpu.memory_space<vmem>>, %arg6: memref<1x128xf32, #tpu.memory_space<vmem>>, %arg7: memref<2x16x128xf32, #tpu.memory_space<vmem>>) attributes {dimension_semantics = [#tpu.dimension_semantics<parallel>], iteration_bounds = array<i64: 2>, scalar_prefetch = 0 : i64, scratch_operands = 0 : i64, tpu.core_type = #tpu.core_type<tc>, window_params = [{transform_indices = @transform_0, window_bounds = array<i64: 2, 16, 64>}, {transform_indices = @transform_1, window_bounds = array<i64: 2, 1, 128>}, {pipeline_mode = #tpu.pipeline_mode<synchronous>, transform_indices = @transform_2, window_bounds = array<i64: 64, 128>}, {pipeline_mode = #tpu.pipeline_mode<synchronous>, transform_indices = @transform_3, window_bounds = array<i64: 1, 128>}, {pipeline_mode = #tpu.pipeline_mode<synchronous>, transform_indices = @transform_4, window_bounds = array<i64: 128, 128>}, {pipeline_mode = #tpu.pipeline_mode<synchronous>, transform_indices = @transform_5, window_bounds = array<i64: 1, 128>}, {transform_indices = @transform_6, window_bounds = array<i64: 2, 16, 128>}]} {
    %c0 = arith.constant 0 : index
    %c0_0 = arith.constant 0 : index
    %c0_1 = arith.constant 0 : index
    %0 = vector.load %arg1[%c0, %c0_0, %c0_1] : memref<2x16x64xf32, #tpu.memory_space<vmem>>, vector<2x16x64xf32>
    %1 = vector.shape_cast %0 : vector<2x16x64xf32> to vector<32x64xf32>
    %c0_2 = arith.constant 0 : index
    %c0_3 = arith.constant 0 : index
    %2 = vector.load %arg3[%c0_2, %c0_3] : memref<64x128xf32, #tpu.memory_space<vmem>>, vector<64x128xf32>
    %cst = arith.constant dense<0.000000e+00> : vector<32x128xf32>
    %3 = tpu.matmul %1, %2, %cst {dimension_numbers = #tpu.dot_dimension_numbers<[1], [0], [0], [1], [0, 0, 1, 1], [], []>} : vector<32x64xf32>, vector<64x128xf32>, vector<32x128xf32> -> vector<32x128xf32>
    %c0_4 = arith.constant 0 : index
    %c0_5 = arith.constant 0 : index
    %4 = vector.load %arg4[%c0_4, %c0_5] : memref<1x128xf32, #tpu.memory_space<vmem>>, vector<1x128xf32>
    %5 = vector.broadcast %4 : vector<1x128xf32> to vector<32x128xf32>
    %6 = arith.addf %3, %5 : vector<32x128xf32>
    %cst_6 = arith.constant 0.000000e+00 : f32
    %7 = vector.broadcast %cst_6 : f32 to vector<32x128xf32>
    %8 = arith.maximumf %6, %7 : vector<32x128xf32>
    %c0_7 = arith.constant 0 : index
    %c0_8 = arith.constant 0 : index
    %9 = vector.load %arg5[%c0_7, %c0_8] : memref<128x128xf32, #tpu.memory_space<vmem>>, vector<128x128xf32>
    %cst_9 = arith.constant dense<0.000000e+00> : vector<32x128xf32>
    %10 = tpu.matmul %8, %9, %cst_9 {dimension_numbers = #tpu.dot_dimension_numbers<[1], [0], [0], [1], [0, 0, 1, 1], [], []>} : vector<32x128xf32>, vector<128x128xf32>, vector<32x128xf32> -> vector<32x128xf32>
    %c0_10 = arith.constant 0 : index
    %c0_11 = arith.constant 0 : index
    %11 = vector.load %arg6[%c0_10, %c0_11] : memref<1x128xf32, #tpu.memory_space<vmem>>, vector<1x128xf32>
    %12 = vector.broadcast %11 : vector<1x128xf32> to vector<32x128xf32>
    %13 = arith.addf %10, %12 : vector<32x128xf32>
    %cst_12 = arith.constant 0.000000e+00 : f32
    %14 = vector.broadcast %cst_12 : f32 to vector<32x128xf32>
    %15 = arith.maximumf %13, %14 : vector<32x128xf32>
    %16 = vector.shape_cast %15 : vector<32x128xf32> to vector<2x16x128xf32>
    %c0_13 = arith.constant 0 : index
    %c0_14 = arith.constant 0 : index
    %c0_15 = arith.constant 0 : index
    %17 = vector.load %arg2[%c0_13, %c0_14, %c0_15] : memref<2x1x128xf32, #tpu.memory_space<vmem>>, vector<2x1x128xf32>
    %18 = vector.broadcast %17 : vector<2x1x128xf32> to vector<2x16x128xf32>
    %19 = arith.mulf %16, %18 : vector<2x16x128xf32>
    %c0_16 = arith.constant 0 : index
    %c0_17 = arith.constant 0 : index
    %c0_18 = arith.constant 0 : index
    %20 = vector.load %arg7[%c0_16, %c0_17, %c0_18] : memref<2x16x128xf32, #tpu.memory_space<vmem>>, vector<2x16x128xf32>
    tpu.vector_store %arg7[%c0_16, %c0_17, %c0_18], %19 {strides = array<i32>} : memref<2x16x128xf32, #tpu.memory_space<vmem>>, vector<2x16x128xf32>,
    return
  }
  func.func @transform_0(%arg0: i32) -> (i32, i32, i32) {
    %c0_i32 = arith.constant 0 : i32
    %c0_i32_0 = arith.constant 0 : i32
    %c0_i32_1 = arith.constant 0 : i32
    return %arg0, %c0_i32, %c0_i32_0 : i32, i32, i32
  }
  func.func @transform_1(%arg0: i32) -> (i32, i32, i32) {
    %c0_i32 = arith.constant 0 : i32
    %c0_i32_0 = arith.constant 0 : i32
    %c0_i32_1 = arith.constant 0 : i32
    return %arg0, %c0_i32, %c0_i32_0 : i32, i32, i32
  }
  func.func @transform_2(%arg0: i32) -> (i32, i32) {
    %c0_i32 = arith.constant 0 : i32
    %c0_i32_0 = arith.constant 0 : i32
    %c0_i32_1 = arith.constant 0 : i32
    return %c0_i32, %c0_i32_0 : i32, i32
  }
  func.func @transform_3(%arg0: i32) -> (i32, i32) {
    %c0_i32 = arith.constant 0 : i32
    %c0_i32_0 = arith.constant 0 : i32
    %c0_i32_1 = arith.constant 0 : i32
    return %c0_i32, %c0_i32_0 : i32, i32
  }
  func.func @transform_4(%arg0: i32) -> (i32, i32) {
    %c0_i32 = arith.constant 0 : i32
    %c0_i32_0 = arith.constant 0 : i32
    %c0_i32_1 = arith.constant 0 : i32
    return %c0_i32, %c0_i32_0 : i32, i32
  }
  func.func @transform_5(%arg0: i32) -> (i32, i32) {
    %c0_i32 = arith.constant 0 : i32
    %c0_i32_0 = arith.constant 0 : i32
    %c0_i32_1 = arith.constant 0 : i32
    return %c0_i32, %c0_i32_0 : i32, i32
  }
  func.func @transform_6(%arg0: i32) -> (i32, i32, i32) {
    %c0_i32 = arith.constant 0 : i32
    %c0_i32_0 = arith.constant 0 : i32
    %c0_i32_1 = arith.constant 0 : i32
    return %arg0, %c0_i32, %c0_i32_0 : i32, i32, i32
  }
}

module attributes {stable_mosaic.version = 11 : i64} {
  func.func @_text_mlp_kernel(%arg0: memref<4x48xf32, #tpu.memory_space<vmem>>, %arg1: memref<48x128xf32, #tpu.memory_space<vmem>>, %arg2: memref<1x128xf32, #tpu.memory_space<vmem>>, %arg3: memref<128x128xf32, #tpu.memory_space<vmem>>, %arg4: memref<1x128xf32, #tpu.memory_space<vmem>>, %arg5: memref<4x128xf32, #tpu.memory_space<vmem>>) attributes {dimension_semantics = [], scalar_prefetch = 0 : i64, scratch_operands = 0 : i64, tpu.core_type = #tpu.core_type<tc>} {
    %c0 = arith.constant 0 : index
    %c0_0 = arith.constant 0 : index
    %0 = vector.load %arg0[%c0, %c0_0] : memref<4x48xf32, #tpu.memory_space<vmem>>, vector<4x48xf32>
    %c0_1 = arith.constant 0 : index
    %c0_2 = arith.constant 0 : index
    %1 = vector.load %arg1[%c0_1, %c0_2] : memref<48x128xf32, #tpu.memory_space<vmem>>, vector<48x128xf32>
    %cst = arith.constant dense<0.000000e+00> : vector<4x128xf32>
    %2 = tpu.matmul %0, %1, %cst {dimension_numbers = #tpu.dot_dimension_numbers<[1], [0], [0], [1], [0, 0, 1, 1], [], []>} : vector<4x48xf32>, vector<48x128xf32>, vector<4x128xf32> -> vector<4x128xf32>
    %c0_3 = arith.constant 0 : index
    %c0_4 = arith.constant 0 : index
    %3 = vector.load %arg2[%c0_3, %c0_4] : memref<1x128xf32, #tpu.memory_space<vmem>>, vector<1x128xf32>
    %4 = vector.broadcast %3 : vector<1x128xf32> to vector<4x128xf32>
    %5 = arith.addf %2, %4 : vector<4x128xf32>
    %cst_5 = arith.constant 0.000000e+00 : f32
    %6 = vector.broadcast %cst_5 : f32 to vector<4x128xf32>
    %7 = arith.maximumf %5, %6 : vector<4x128xf32>
    %c0_6 = arith.constant 0 : index
    %c0_7 = arith.constant 0 : index
    %8 = vector.load %arg3[%c0_6, %c0_7] : memref<128x128xf32, #tpu.memory_space<vmem>>, vector<128x128xf32>
    %cst_8 = arith.constant dense<0.000000e+00> : vector<4x128xf32>
    %9 = tpu.matmul %7, %8, %cst_8 {dimension_numbers = #tpu.dot_dimension_numbers<[1], [0], [0], [1], [0, 0, 1, 1], [], []>} : vector<4x128xf32>, vector<128x128xf32>, vector<4x128xf32> -> vector<4x128xf32>
    %c0_9 = arith.constant 0 : index
    %c0_10 = arith.constant 0 : index
    %10 = vector.load %arg4[%c0_9, %c0_10] : memref<1x128xf32, #tpu.memory_space<vmem>>, vector<1x128xf32>
    %11 = vector.broadcast %10 : vector<1x128xf32> to vector<4x128xf32>
    %12 = arith.addf %9, %11 : vector<4x128xf32>
    %cst_11 = arith.constant 0.000000e+00 : f32
    %13 = vector.broadcast %cst_11 : f32 to vector<4x128xf32>
    %14 = arith.maximumf %12, %13 : vector<4x128xf32>
    %c0_12 = arith.constant 0 : index
    %c0_13 = arith.constant 0 : index
    %15 = vector.load %arg5[%c0_12, %c0_13] : memref<4x128xf32, #tpu.memory_space<vmem>>, vector<4x128xf32>
    tpu.vector_store %arg5[%c0_12, %c0_13], %14 {strides = array<i32>} : memref<4x128xf32, #tpu.memory_space<vmem>>, vector<4x128xf32>,
    return
  }
}

</mosaic_0001>

<llo_original>
// kernel: two_layer_element_multiply.3
$region0: #{two_layer_element_multiply.3}
  #allocation0 [shape = 'u32[]', space=smem, size = 0x4, offset = 0x4, fixed_abs, tag = 'smem constant byte address 0x4 - core index']
  #allocation1 [shape = 'u32[72,128]{1,0:T(1,128)}', space=vmem, size = 0x9000, scoped, tag = 'internal scratch']
  %s0 = inlined_call_operand.hbm [shape: f32[4,16,64], index: 0, kind: input, shape index: {}]
  %s1 = inlined_call_operand.vmem [shape: f32[4,1,128], index: 1, kind: input, shape index: {}]
  %s2 = inlined_call_operand.hbm [shape: f32[64,128], index: 2, kind: input, shape index: {}]
  %s3 = inlined_call_operand.vmem [shape: f32[1,128], index: 3, kind: input, shape index: {}]
  %s4 = inlined_call_operand.hbm [shape: f32[128,128], index: 4, kind: input, shape index: {}]
  %s5 = inlined_call_operand.vmem [shape: f32[1,128], index: 5, kind: input, shape index: {}]
  %s6 = inlined_call_operand.hbm [shape: f32[4,16,128], index: 6, kind: output, shape index: {}]
  %s7 = sld [smem:[#allocation0]]
  $region69: #{two_layer_element_multiply.3} parent=0
    _
  %s9 = ssub.s32 1, %s7
  %s10 = scalar_select 0, %s9, %s7
  $region1: #{two_layer_element_multiply.3} parent=0
    #allocation2 [shape = 'u8[32768]{0}', space=vmem, size = 0x8000, scoped, tag = 'input window, operand 0']
    #allocation3 [shape = 's32[2]{0}', space=sflag, size = 0x8, scoped, tag = 'scoped memory for two_layer_element_multiply.3']
    #allocation4 [shape = 's32[2]{0}', space=sflag, size = 0x8, scoped, tag = 'scoped memory for two_layer_element_multiply.3']
    #allocation5 [shape = 'u8[32768]{0}', space=vmem, size = 0x8000, scoped, tag = 'input window, operand 2, single buffered']
    #allocation6 [shape = 's32[1]{0}', space=sflag, size = 0x4, scoped, tag = 'scoped memory for two_layer_element_multiply.3']
    #allocation7 [shape = 'u8[65536]{0}', space=vmem, size = 0x10000, scoped, tag = 'input window, operand 4, single buffered']
    #allocation8 [shape = 'u8[32768]{0}', space=vmem, size = 0x8000, scoped, tag = 'output window, operand 0']
    %11 = vsyncpa [#allocation3], 0
    %s12 = scalar_lea.sflag [#allocation3], 1
    %13 = vsyncpa %s12, 0
    %14 = vsyncpa [#allocation6], 0
    %15 = vsyncpa [#allocation4], 0
    %s16 = scalar_lea.sflag [#allocation4], 1
    %17 = vsyncpa %s16, 0
    loop: start=0, step=1, limit=4
    $region2: #{two_layer_element_multiply.3} parent=1 // loop_pre_header
      _
    $region3: #{two_layer_element_multiply.3} parent=1 // loop_header
      %s19 = sphi 0, %s23
      %p20 = scmp.ge.s32.totalorder %s19, 4
      %s29 = sphi 0, %s31
      %s32 = sphi 0, %s29
      %s33 = sphi 0, %s32
      %s49 = sphi 0, %s33
      %s55 = sphi 0, %s57
      %s58 = sphi 0, %s55
      %s59 = sphi 0, %s58
      %s75 = sphi 0, %s59
      %s79 = sphi 0, %s79
      %s81 = sphi 0, %s79
      %s82 = sphi 0, %s81
      %s96 = sphi 0, %s82
      %s100 = sphi 0, %s100
      %s102 = sphi 0, %s100
      %s103 = sphi 0, %s102
      %s117 = sphi 0, %s103
      %s121 = sphi 0, %s121
      %s123 = sphi 0, %s121
      %s124 = sphi 0, %s123
      %s138 = sphi 0, %s124
      %s142 = sphi 0, %s142
      %s144 = sphi 0, %s142
      %s145 = sphi 0, %s144
      %s159 = sphi 0, %s145
      %s165 = sphi 0, %s167
      %s168 = sphi 0, %s165
      %s169 = sphi 0, %s168
      %s185 = sphi 0, %s169
    $region4: #{two_layer_element_multiply.3} parent=1 // loop_header_branch
      %22 = sbr.rel (%p20) target = $region8
    $region5: #{two_layer_element_multiply.3} parent=1 // loop_body
      %s24 = ssub.s32 %s19, 1
      %s25 = ssub.s32 %s19, 2
      %s26 = sadd.s32 %s19, 1
      %s27 = ssub.s32 %s19, %s26
      %p28 = scmp.eq.s32.totalorder %s27, 0
      %s30 = sadd.s32 %s29, 1
      %s31 = scalar_select %p28, %s29, %s30
      %p34 = pneg %p28
      %p35 = scmp.eq.s32.totalorder %s19, 1
      %p36 = por %p34, %p35
      %p37 = scmp.ne.s32.totalorder %s29, %s32
      %p38 = scmp.eq.s32.totalorder %s19, 0
      %p39 = por %p37, %p38
      %p40 = scmp.ne.s32.totalorder %s29, %s32
      %p41 = scmp.eq.s32.totalorder %s24, 1
      %p42 = por %p40, %p41
      %p43 = scmp.ne.s32.totalorder %s32, %s33
      %p44 = scmp.eq.s32.totalorder %s24, 0
      %p45 = por %p43, %p44
      %p46 = scmp.ne.s32.totalorder %s32, %s33
      %p47 = scmp.eq.s32.totalorder %s25, 1
      %p48 = por %p46, %p47
      %p50 = scmp.ne.s32.totalorder %s33, %s49
      %p51 = scmp.eq.s32.totalorder %s25, 0
      %p52 = por %p50, %p51
      %s53 = ssub.s32 %s19, %s26
      %p54 = scmp.eq.s32.totalorder %s53, 0
      %s56 = sadd.s32 %s55, 1
      %s57 = scalar_select %p54, %s55, %s56
      %p60 = pneg %p54
      %p61 = scmp.eq.s32.totalorder %s19, 1
      %p62 = por %p60, %p61
      %p63 = scmp.ne.s32.totalorder %s55, %s58
      %p64 = scmp.eq.s32.totalorder %s19, 0
      %p65 = por %p63, %p64
      %p66 = scmp.ne.s32.totalorder %s55, %s58
      %p67 = scmp.eq.s32.totalorder %s24, 1
      %p68 = por %p66, %p67
      %p69 = scmp.ne.s32.totalorder %s58, %s59
      %p70 = scmp.eq.s32.totalorder %s24, 0
      %p71 = por %p69, %p70
      %p72 = scmp.ne.s32.totalorder %s58, %s59
      %p73 = scmp.eq.s32.totalorder %s25, 1
      %p74 = por %p72, %p73
      %p76 = scmp.ne.s32.totalorder %s59, %s75
      %p77 = scmp.eq.s32.totalorder %s25, 0
      %p78 = por %p76, %p77
      %s80 = sadd.s32 %s79, 1
      %p83 = scmp.eq.s32.totalorder %s19, 1
      %p84 = scmp.ne.s32.totalorder %s79, %s81
      %p85 = scmp.eq.s32.totalorder %s19, 0
      %p86 = por %p84, %p85
      %p87 = scmp.ne.s32.totalorder %s79, %s81
      %p88 = scmp.eq.s32.totalorder %s24, 1
      %p89 = por %p87, %p88
      %p90 = scmp.ne.s32.totalorder %s81, %s82
      %p91 = scmp.eq.s32.totalorder %s24, 0
      %p92 = por %p90, %p91
      %p93 = scmp.ne.s32.totalorder %s81, %s82
      %p94 = scmp.eq.s32.totalorder %s25, 1
      %p95 = por %p93, %p94
      %p97 = scmp.ne.s32.totalorder %s82, %s96
      %p98 = scmp.eq.s32.totalorder %s25, 0
      %p99 = por %p97, %p98
      %s101 = sadd.s32 %s100, 1
      %p104 = scmp.eq.s32.totalorder %s19, 1
      %p105 = scmp.ne.s32.totalorder %s100, %s102
      %p106 = scmp.eq.s32.totalorder %s19, 0
      %p107 = por %p105, %p106
      %p108 = scmp.ne.s32.totalorder %s100, %s102
      %p109 = scmp.eq.s32.totalorder %s24, 1
      %p110 = por %p108, %p109
      %p111 = scmp.ne.s32.totalorder %s102, %s103
      %p112 = scmp.eq.s32.totalorder %s24, 0
      %p113 = por %p111, %p112
      %p114 = scmp.ne.s32.totalorder %s102, %s103
      %p115 = scmp.eq.s32.totalorder %s25, 1
      %p116 = por %p114, %p115
      %p118 = scmp.ne.s32.totalorder %s103, %s117
      %p119 = scmp.eq.s32.totalorder %s25, 0
      %p120 = por %p118, %p119
      %s122 = sadd.s32 %s121, 1
      %p125 = scmp.eq.s32.totalorder %s19, 1
      %p126 = scmp.ne.s32.totalorder %s121, %s123
      %p127 = scmp.eq.s32.totalorder %s19, 0
      %p128 = por %p126, %p127
      %p129 = scmp.ne.s32.totalorder %s121, %s123
      %p130 = scmp.eq.s32.totalorder %s24, 1
      %p131 = por %p129, %p130
      %p132 = scmp.ne.s32.totalorder %s123, %s124
      %p133 = scmp.eq.s32.totalorder %s24, 0
      %p134 = por %p132, %p133
      %p135 = scmp.ne.s32.totalorder %s123, %s124
      %p136 = scmp.eq.s32.totalorder %s25, 1
      %p137 = por %p135, %p136
      %p139 = scmp.ne.s32.totalorder %s124, %s138
      %p140 = scmp.eq.s32.totalorder %s25, 0
      %p141 = por %p139, %p140
      %s143 = sadd.s32 %s142, 1
      %p146 = scmp.eq.s32.totalorder %s19, 1
      %p147 = scmp.ne.s32.totalorder %s142, %s144
      %p148 = scmp.eq.s32.totalorder %s19, 0
      %p149 = por %p147, %p148
      %p150 = scmp.ne.s32.totalorder %s142, %s144
      %p151 = scmp.eq.s32.totalorder %s24, 1
      %p152 = por %p150, %p151
      %p153 = scmp.ne.s32.totalorder %s144, %s145
      %p154 = scmp.eq.s32.totalorder %s24, 0
      %p155 = por %p153, %p154
      %p156 = scmp.ne.s32.totalorder %s144, %s145
      %p157 = scmp.eq.s32.totalorder %s25, 1
      %p158 = por %p156, %p157
      %p160 = scmp.ne.s32.totalorder %s145, %s159
      %p161 = scmp.eq.s32.totalorder %s25, 0
      %p162 = por %p160, %p161
      %s163 = ssub.s32 %s19, %s26
      %p164 = scmp.eq.s32.totalorder %s163, 0
      %s166 = sadd.s32 %s165, 1
      %s167 = scalar_select %p164, %s165, %s166
      %p170 = pneg %p164
      %p171 = scmp.eq.s32.totalorder %s19, 1
      %p172 = por %p170, %p171
      %p173 = scmp.ne.s32.totalorder %s165, %s168
      %p174 = scmp.eq.s32.totalorder %s19, 0
      %p175 = por %p173, %p174
      %p176 = scmp.ne.s32.totalorder %s165, %s168
      %p177 = scmp.eq.s32.totalorder %s24, 1
      %p178 = por %p176, %p177
      %p179 = scmp.ne.s32.totalorder %s168, %s169
      %p180 = scmp.eq.s32.totalorder %s24, 0
      %p181 = por %p179, %p180
      %p182 = scmp.ne.s32.totalorder %s168, %s169
      %p183 = scmp.eq.s32.totalorder %s25, 1
      %p184 = por %p182, %p183
      %p186 = scmp.ne.s32.totalorder %s169, %s185
      %p187 = scmp.eq.s32.totalorder %s25, 0
      %p188 = por %p186, %p187
      %p189 = scmp.le.s32.totalorder 1, %s19
      %p190 = scmp.lt.s32.totalorder %s19, 3
      %p191 = pnand %p189, %p190
      %p192 = pneg %p191
      // Predicated region
      $region9: #{two_layer_element_multiply.3} parent=5 // pred_check
        _
      $region10: #{two_layer_element_multiply.3} parent=5 // pred_check_branch
        %194 = sbr.rel (%p191) target = $region12
      $region11: #{two_layer_element_multiply.3} parent=5 // pred_region
        %s195 = ssub.s32 %s19, 1
        // Predicated region
        $region13: #{two_layer_element_multiply.3} parent=11 // pred_check
          %p196 = pneg %p92
        $region14: #{two_layer_element_multiply.3} parent=11 // pred_check_branch
          %198 = sbr.rel (%p196) target = $region16
        $region15: #{two_layer_element_multiply.3} parent=11 // pred_region
          %200 = vsyncadd [#allocation6], 0
          %s201 = sshll.u32 %s2, 4
          %s202 = int_to_ptr.hbm [resolvable:$true] %s201
          %s203 = sshll.u32 [#allocation5], 4
          %s204 = int_to_ptr.vmem [resolvable:$true] %s203
          %209 = dma.hbm_to_vmem [thread:$0]  %s202, 1024, %s204, [#allocation6], 128, 128, 8
        $region16: #{two_layer_element_multiply.3} parent=11 // pred_fallthru
          _
        // Predicated region
        $region17: #{two_layer_element_multiply.3} parent=11 // pred_check
          %p210 = pneg %p113
        $region18: #{two_layer_element_multiply.3} parent=11 // pred_check_branch
          %212 = sbr.rel (%p210) target = $region20
        $region19: #{two_layer_element_multiply.3} parent=11 // pred_region
          _
        $region20: #{two_layer_element_multiply.3} parent=11 // pred_fallthru
          _
        // Predicated region
        $region21: #{two_layer_element_multiply.3} parent=11 // pred_check
          %p213 = pneg %p134
        $region22: #{two_layer_element_multiply.3} parent=11 // pred_check_branch
          %215 = sbr.rel (%p213) target = $region24
        $region23: #{two_layer_element_multiply.3} parent=11 // pred_region
          %217 = vsyncadd [#allocation6], 0
          %s218 = sshll.u32 %s4, 4
          %s219 = int_to_ptr.hbm [resolvable:$true] %s218
          %s220 = sshll.u32 [#allocation7], 4
          %s221 = int_to_ptr.vmem [resolvable:$true] %s220
          %226 = dma.hbm_to_vmem [thread:$0]  %s219, 2048, %s221, [#allocation6], 128, 128, 8
        $region24: #{two_layer_element_multiply.3} parent=11 // pred_fallthru
          _
        // Predicated region
        $region25: #{two_layer_element_multiply.3} parent=11 // pred_check
          %p227 = pneg %p155
        $region26: #{two_layer_element_multiply.3} parent=11 // pred_check_branch
          %229 = sbr.rel (%p227) target = $region28
        $region27: #{two_layer_element_multiply.3} parent=11 // pred_region
          _
        $region28: #{two_layer_element_multiply.3} parent=11 // pred_fallthru
          _
      $region12: #{two_layer_element_multiply.3} parent=5 // pred_fallthru
        _
      %p230 = scmp.lt.s32.totalorder %s19, 2
      // Predicated region
      $region29: #{two_layer_element_multiply.3} parent=5 // pred_check
        %p231 = pneg %p230
      $region30: #{two_layer_element_multiply.3} parent=5 // pred_check_branch
        %233 = sbr.rel (%p231) target = $region32
      $region31: #{two_layer_element_multiply.3} parent=5 // pred_region
        // Predicated region
        $region33: #{two_layer_element_multiply.3} parent=31 // pred_check
          %p234 = pneg %p39
        $region34: #{two_layer_element_multiply.3} parent=31 // pred_check_branch
          %236 = sbr.rel (%p234) target = $region36
        $region35: #{two_layer_element_multiply.3} parent=31 // pred_region
          %s237 = sand.u32 %s29, 1
          %s238 = scalar_lea.sflag [#allocation3], %s237
          %s239 = sand.u32 %s29, 1
          %s240 = smul.addr %s239, 32
          %s241 = scalar_lea.vmem [#allocation2], %s240
          %s242 = smul.u32 2, %s19
          %244 = vsyncadd %s238, 0
          %s245 = smul.addr %s242, 2
          %s246 = smul.addr %s245, 8
          %s247 = scalar_lea.hbm %s0, %s246
          %s248 = sshll.u32 %s247, 4
          %s249 = int_to_ptr.hbm [resolvable:$true] %s248
          %s250 = sshll.u32 %s241, 4
          %s251 = int_to_ptr.vmem [resolvable:$true] %s250
          %256 = dma.hbm_to_vmem [thread:$0]  %s249, 512, %s251, %s238, 128, 128, 8
        $region36: #{two_layer_element_multiply.3} parent=31 // pred_fallthru
          _
        // Predicated region
        $region37: #{two_layer_element_multiply.3} parent=31 // pred_check
          %p257 = pneg %p65
        $region38: #{two_layer_element_multiply.3} parent=31 // pred_check_branch
          %259 = sbr.rel (%p257) target = $region40
        $region39: #{two_layer_element_multiply.3} parent=31 // pred_region
          %s260 = smul.u32 2, %s19
          %p261 = scmp.lt.s32.totalorder %s260, 3
          %s262 = scalar_select %p261, %s260, 3
          %s263 = scalar_lea.vmem %s1, %s262
          %s264 = smul.u32 2, %s19
        $region40: #{two_layer_element_multiply.3} parent=31 // pred_fallthru
          _
      $region32: #{two_layer_element_multiply.3} parent=5 // pred_fallthru
        _
      %p265 = scmp.le.s32.totalorder 1, %s19
      %p266 = scmp.lt.s32.totalorder %s19, 3
      %p267 = pnand %p265, %p266
      %p268 = pneg %p267
      // Predicated region
      $region41: #{two_layer_element_multiply.3} parent=5 // pred_check
        _
      $region42: #{two_layer_element_multiply.3} parent=5 // pred_check_branch
        %270 = sbr.rel (%p267) target = $region44
      $region43: #{two_layer_element_multiply.3} parent=5 // pred_region
        %s271 = ssub.s32 %s19, 1
        %s272 = sand.u32 %s32, 1
        %s273 = scalar_lea.sflag [#allocation3], %s272
        %s274 = sand.u32 %s32, 1
        %s275 = smul.addr %s274, 32
        %s276 = scalar_lea.vmem [#allocation2], %s275
        // Predicated region
        $region45: #{two_layer_element_multiply.3} parent=43 // pred_check
          %p277 = pneg %p45
        $region46: #{two_layer_element_multiply.3} parent=43 // pred_check_branch
          %279 = sbr.rel (%p277) target = $region48
        $region47: #{two_layer_element_multiply.3} parent=43 // pred_region
          %281 = dma.done %s273, 512
        $region48: #{two_layer_element_multiply.3} parent=43 // pred_fallthru
          _
        // Predicated region
        $region49: #{two_layer_element_multiply.3} parent=43 // pred_check
          %p282 = pneg %p92
        $region50: #{two_layer_element_multiply.3} parent=43 // pred_check_branch
          %284 = sbr.rel (%p282) target = $region52
        $region51: #{two_layer_element_multiply.3} parent=43 // pred_region
          %286 = dma.done [#allocation6], 1024
        $region52: #{two_layer_element_multiply.3} parent=43 // pred_fallthru
          _
        // Predicated region
        $region53: #{two_layer_element_multiply.3} parent=43 // pred_check
          %p287 = pneg %p134
        $region54: #{two_layer_element_multiply.3} parent=43 // pred_check_branch
          %289 = sbr.rel (%p287) target = $region56
        $region55: #{two_layer_element_multiply.3} parent=43 // pred_region
          %291 = dma.done [#allocation6], 2048
        $region56: #{two_layer_element_multiply.3} parent=43 // pred_fallthru
          _
        %s292 = sand.u32 %s32, 1
        %s293 = scalar_lea.sflag [#allocation3], %s292
        %s294 = sand.u32 %s32, 1
        %s295 = smul.addr %s294, 32
        %s296 = scalar_lea.vmem [#allocation2], %s295
        %p297 = pneg %p45
        %p298 = pneg %p42
        %s299 = smul.u32 2, %s24
        %p300 = scmp.lt.s32.totalorder %s299, 3
        %s301 = scalar_select %p300, %s299, 3
        %s302 = scalar_lea.vmem %s1, %s301
        %p303 = pneg %p71
        %p304 = pneg %p68
        %p305 = pneg %p92
        %p306 = pneg %p89
        %p307 = pneg %p113
        %p308 = pneg %p110
        %p309 = pneg %p134
        %p310 = pneg %p131
        %p311 = pneg %p155
        %p312 = pneg %p152
        %p313 = pneg %p181
        %p314 = pneg %p178
        %s315 = sand.u32 %s168, 1
        %s316 = scalar_lea.sflag [#allocation4], %s315
        %s317 = sand.u32 %s168, 1
        %s318 = smul.addr %s317, 32
        %s319 = scalar_lea.vmem [#allocation8], %s318
        %s320 = smul.u32 2, %s24
        %s321 = smul.u32 2, %s24
        %p322 = scmp.lt.s32.totalorder %s321, 3
        %s323 = scalar_select %p322, %s321, 3
        %s324 = scalar_lea.vmem %s1, %s323
        %s325 = smul.u32 2, %s24
        %s326 = smul.u32 2, %s24
        %v327 = vld [vmem:[%s276] sm:$0xff]
        %v328 = vld [vmem:[%s276 + $0x8] sm:$0xff]
        %v329 = vld [vmem:[%s276 + $0x10] sm:$0xff]
        %v330 = vld [vmem:[%s276 + $0x18] sm:$0xff]
        %v331 = vld [vmem:[#allocation5] sm:$0xff]
        %v332 = vld [vmem:[#allocation5 + $0x8] sm:$0xff]
        %v333 = vld [vmem:[#allocation5 + $0x10] sm:$0xff]
        %v334 = vld [vmem:[#allocation5 + $0x18] sm:$0xff]
        %v335 = vld [vmem:[#allocation5 + $0x20] sm:$0xff]
        %v336 = vld [vmem:[#allocation5 + $0x28] sm:$0xff]
        %v337 = vld [vmem:[#allocation5 + $0x30] sm:$0xff]
        %v338 = vld [vmem:[#allocation5 + $0x38] sm:$0xff]
        %v339 = vld [vmem:[%s3] sm:$0x1]
        %v341 = vperm.slane %v339, 0
        %vm343 = vcmask 523264
        %v345 = vsel %vm343, %v327, 0
        %v348 = vsel %vm343, %v328, 0
        %v351 = vsel %vm343, %v329, 0
        %v354 = vsel %vm343, %v330, 0
        %356 = vmatpush.msra.mxu0 0.0
        %357 = vmatpush.msra.mxu0 0.0
        %358 = vmatpush.msra.mxu0 0.0
        %359 = vmatpush.msra.mxu0 0.0
        %360 = vmatpush.msra.mxu0 0.0
        %361 = vmatpush.msra.mxu0 0.0
        %362 = vmatpush.msra.mxu0 0.0
        %363 = vmatpush.msra.mxu0 0.0
        %364 = vmatpush.msra.mxu0 %v338
        %365 = vmatpush.msra.mxu0 %v337
        %366 = vmatpush.msra.mxu0 %v336
        %367 = vmatpush.msra.mxu0 %v335
        %368 = vmatpush.msra.mxu0 %v334
        %369 = vmatpush.msra.mxu0 %v333
        %370 = vmatpush.msra.mxu0 %v332
        %371 = vmatpush.msra.mxu0 %v331
        %372 = vmatmul.f32.gmra.mxu0 %v345
        %v373 = vpop.f32.mrf.mxu0
        %v374 = vadd.f32 %v341, %v373
        %375 = vmatmul.f32.gmra.mxu0 %v348
        %v376 = vpop.f32.mrf.mxu0
        %v377 = vadd.f32 %v341, %v376
        %378 = vmatmul.f32.gmra.mxu0 %v351
        %v379 = vpop.f32.mrf.mxu0
        %v380 = vadd.f32 %v341, %v379
        %381 = vmatmul.f32.gmra.mxu0 %v354
        %v382 = vpop.f32.mrf.mxu0
        %v383 = vadd.f32 %v341, %v382
        %384 = vdwg.mxu0
        %v385 = vmax.f32 %v374, 0.0
        %v386 = vmax.f32 %v377, 0.0
        %v387 = vmax.f32 %v380, 0.0
        %v388 = vmax.f32 %v383, 0.0
        %v389 = vld [vmem:[#allocation7] sm:$0xff]
        %v390 = vld [vmem:[#allocation7 + $0x8] sm:$0xff]
        %v391 = vld [vmem:[#allocation7 + $0x10] sm:$0xff]
        %v392 = vld [vmem:[#allocation7 + $0x18] sm:$0xff]
        %v393 = vld [vmem:[#allocation7 + $0x20] sm:$0xff]
        %v394 = vld [vmem:[#allocation7 + $0x28] sm:$0xff]
        %v395 = vld [vmem:[#allocation7 + $0x30] sm:$0xff]
        %v396 = vld [vmem:[#allocation7 + $0x38] sm:$0xff]
        %v397 = vld [vmem:[#allocation7 + $0x40] sm:$0xff]
        %v398 = vld [vmem:[#allocation7 + $0x48] sm:$0xff]
        %v399 = vld [vmem:[#allocation7 + $0x50] sm:$0xff]
        %v400 = vld [vmem:[#allocation7 + $0x58] sm:$0xff]
        %v401 = vld [vmem:[#allocation7 + $0x60] sm:$0xff]
        %v402 = vld [vmem:[#allocation7 + $0x68] sm:$0xff]
        %v403 = vld [vmem:[#allocation7 + $0x70] sm:$0xff]
        %v404 = vld [vmem:[#allocation7 + $0x78] sm:$0xff]
        %v405 = vld [vmem:[%s5] sm:$0x1]
        %v407 = vperm.slane %v405, 0
        %409 = vmatpush.msra.mxu0 %v404
        %410 = vmatpush.msra.mxu0 %v403
        %411 = vmatpush.msra.mxu0 %v402
        %412 = vmatpush.msra.mxu0 %v401
        %413 = vmatpush.msra.mxu0 %v400
        %414 = vmatpush.msra.mxu0 %v399
        %415 = vmatpush.msra.mxu0 %v398
        %416 = vmatpush.msra.mxu0 %v397
        %417 = vmatpush.msra.mxu0 %v396
        %418 = vmatpush.msra.mxu0 %v395
        %419 = vmatpush.msra.mxu0 %v394
        %420 = vmatpush.msra.mxu0 %v393
        %421 = vmatpush.msra.mxu0 %v392
        %422 = vmatpush.msra.mxu0 %v391
        %423 = vmatpush.msra.mxu0 %v390
        %424 = vmatpush.msra.mxu0 %v389
        %425 = vmatmul.f32.gmra.mxu0 %v385
        %v426 = vpop.f32.mrf.mxu0
        %v427 = vadd.f32 %v407, %v426
        %428 = vmatmul.f32.gmra.mxu0 %v386
        %v429 = vpop.f32.mrf.mxu0
        %v430 = vadd.f32 %v407, %v429
        %431 = vmatmul.f32.gmra.mxu0 %v387
        %v432 = vpop.f32.mrf.mxu0
        %v433 = vadd.f32 %v407, %v432
        %434 = vmatmul.f32.gmra.mxu0 %v388
        %v435 = vpop.f32.mrf.mxu0
        %v436 = vadd.f32 %v407, %v435
        %437 = vdwg.mxu0
        %v438 = vmax.f32 %v427, 0.0
        %v439 = vmax.f32 %v430, 0.0
        %v440 = vmax.f32 %v433, 0.0
        %v441 = vmax.f32 %v436, 0.0
        %v442 = vld [vmem:[%s324] sm:$0x1]
        %v443 = vld [vmem:[%s324 + $0x1] sm:$0x1]
        %v446 = vperm.slane %v442, 0
        %v447 = vperm.slane %v443, 0
        %v450 = vmul.f32 %v438, %v446
        %v451 = vmul.f32 %v439, %v446
        %v452 = vmul.f32 %v440, %v447
        %v453 = vmul.f32 %v441, %v447
        %454 = vst [vmem:[%s319] sm:$0xff] %v450
        %455 = vst [vmem:[%s319 + $0x8] sm:$0xff] %v451
        %456 = vst [vmem:[%s319 + $0x10] sm:$0xff] %v452
        %457 = vst [vmem:[%s319 + $0x18] sm:$0xff] %v453
        %s458 = sand.u32 %s168, 1
        %s459 = scalar_lea.sflag [#allocation4], %s458
        %s460 = sand.u32 %s168, 1
        %s461 = smul.addr %s460, 32
        %s462 = scalar_lea.vmem [#allocation8], %s461
        // Predicated region
        $region57: #{two_layer_element_multiply.3} parent=43 // pred_check
          %p463 = pneg %p178
        $region58: #{two_layer_element_multiply.3} parent=43 // pred_check_branch
          %465 = sbr.rel (%p463) target = $region60
        $region59: #{two_layer_element_multiply.3} parent=43 // pred_region
          %s466 = smul.u32 2, %s24
          %468 = vsyncadd %s459, 0
          %s469 = smul.addr %s466, 2
          %s470 = smul.addr %s469, 8
          %s471 = scalar_lea.hbm %s6, %s470
          %s472 = sshll.u32 %s462, 4
          %s473 = int_to_ptr.vmem [resolvable:$true] %s472
          %s474 = sshll.u32 %s471, 4
          %s475 = int_to_ptr.hbm [resolvable:$true] %s474
          %480 = dma.vmem_to_hbm [thread:$0]  %s473, 512, %s475, %s459, 128, 128, 8
        $region60: #{two_layer_element_multiply.3} parent=43 // pred_fallthru
          _
      $region44: #{two_layer_element_multiply.3} parent=5 // pred_fallthru
        _
      %p481 = scmp.le.s32.totalorder 2, %s19
      // Predicated region
      $region61: #{two_layer_element_multiply.3} parent=5 // pred_check
        %p482 = pneg %p481
      $region62: #{two_layer_element_multiply.3} parent=5 // pred_check_branch
        %484 = sbr.rel (%p482) target = $region64
      $region63: #{two_layer_element_multiply.3} parent=5 // pred_region
        %s485 = ssub.s32 %s19, 2
        // Predicated region
        $region65: #{two_layer_element_multiply.3} parent=63 // pred_check
          %p486 = pneg %p184
        $region66: #{two_layer_element_multiply.3} parent=63 // pred_check_branch
          %488 = sbr.rel (%p486) target = $region68
        $region67: #{two_layer_element_multiply.3} parent=63 // pred_region
          %s489 = sand.u32 %s169, 1
          %s490 = scalar_lea.sflag [#allocation4], %s489
          %s491 = sand.u32 %s169, 1
          %s492 = smul.addr %s491, 32
          %s493 = scalar_lea.vmem [#allocation8], %s492
          %495 = dma.done %s490, 512
        $region68: #{two_layer_element_multiply.3} parent=63 // pred_fallthru
          _
      $region64: #{two_layer_element_multiply.3} parent=5 // pred_fallthru
        _
    $region6: #{two_layer_element_multiply.3} parent=1 // loop_footer
      %s23 = sadd.s32 1, %s19
    $region7: #{two_layer_element_multiply.3} parent=1 // loop_footer_branch
      %18 = sbr.rel target = $region3
    $region8: #{two_layer_element_multiply.3} parent=1 // loop_exit
      _
    %496 = vsyncpa [#allocation3], 1
    %s497 = scalar_lea.sflag [#allocation3], 1
    %498 = vsyncpa %s497, 1
    %499 = vsyncpa [#allocation6], 1
    %500 = vsyncpa [#allocation4], 1
    %s501 = scalar_lea.sflag [#allocation4], 1
    %502 = vsyncpa %s501, 1

// kernel: two_layer_element_multiply.2
$region0: #{two_layer_element_multiply.2}
  #allocation0 [shape = 'u32[]', space=smem, size = 0x4, offset = 0x4, fixed_abs, tag = 'smem constant byte address 0x4 - core index']
  #allocation1 [shape = 'u32[72,128]{1,0:T(1,128)}', space=vmem, size = 0x9000, scoped, tag = 'internal scratch']
  %s0 = inlined_call_operand.hbm [shape: f32[4,48], index: 0, kind: input, shape index: {}]
  %s1 = inlined_call_operand.hbm [shape: f32[48,128], index: 1, kind: input, shape index: {}]
  %s2 = inlined_call_operand.vmem [shape: f32[1,128], index: 2, kind: input, shape index: {}]
  %s3 = inlined_call_operand.hbm [shape: f32[128,128], index: 3, kind: input, shape index: {}]
  %s4 = inlined_call_operand.vmem [shape: f32[1,128], index: 4, kind: input, shape index: {}]
  %s5 = inlined_call_operand.vmem [shape: f32[4,128], index: 5, kind: output, shape index: {}]
  %s6 = sld [smem:[#allocation0]]
  $region42: #{two_layer_element_multiply.2} parent=0
    _
  %s8 = ssub.s32 1, %s6
  %s9 = scalar_select 0, %s8, %s6
  $region1: #{two_layer_element_multiply.2} parent=0
    #allocation2 [shape = 'u8[2048]{0}', space=vmem, size = 0x800, scoped, tag = 'input window, operand 0, single buffered']
    #allocation3 [shape = 's32[1]{0}', space=sflag, size = 0x4, scoped, tag = 'scoped memory for two_layer_element_multiply.2']
    #allocation4 [shape = 'u8[24576]{0}', space=vmem, size = 0x6000, scoped, tag = 'input window, operand 1, single buffered']
    #allocation5 [shape = 's32[1]{0}', space=sflag, size = 0x4, scoped, tag = 'scoped memory for two_layer_element_multiply.2']
    #allocation6 [shape = 'u8[65536]{0}', space=vmem, size = 0x10000, scoped, tag = 'input window, operand 3, single buffered']
    %10 = vsyncpa [#allocation3], 0
    %11 = vsyncpa [#allocation5], 0
    // Predicated region
    $region2: #{two_layer_element_multiply.2} parent=1 // pred_check
      _
    $region3: #{two_layer_element_multiply.2} parent=1 // pred_check_branch
      %13 = sbr.rel (0) target = $region5
    $region4: #{two_layer_element_multiply.2} parent=1 // pred_region
      %15 = vsyncadd [#allocation3], 0
      %s17 = sshll.u32 %s0, 4
      %s18 = int_to_ptr.hbm [resolvable:$true] %s17
      %s19 = sshll.u32 [#allocation2], 4
      %s20 = int_to_ptr.vmem [resolvable:$true] %s19
      %22 = dma.hbm_to_vmem [thread:$0]  %s18, 64, %s20, [#allocation3]
    $region5: #{two_layer_element_multiply.2} parent=1 // pred_fallthru
      _
    // Predicated region
    $region6: #{two_layer_element_multiply.2} parent=1 // pred_check
      _
    $region7: #{two_layer_element_multiply.2} parent=1 // pred_check_branch
      %24 = sbr.rel (0) target = $region9
    $region8: #{two_layer_element_multiply.2} parent=1 // pred_region
      %26 = vsyncadd [#allocation5], 0
      %s27 = sshll.u32 %s1, 4
      %s28 = int_to_ptr.hbm [resolvable:$true] %s27
      %s29 = sshll.u32 [#allocation4], 4
      %s30 = int_to_ptr.vmem [resolvable:$true] %s29
      %35 = dma.hbm_to_vmem [thread:$0]  %s28, 768, %s30, [#allocation5], 128, 128, 8
    $region9: #{two_layer_element_multiply.2} parent=1 // pred_fallthru
      _
    // Predicated region
    $region10: #{two_layer_element_multiply.2} parent=1 // pred_check
      _
    $region11: #{two_layer_element_multiply.2} parent=1 // pred_check_branch
      %37 = sbr.rel (0) target = $region13
    $region12: #{two_layer_element_multiply.2} parent=1 // pred_region
      _
    $region13: #{two_layer_element_multiply.2} parent=1 // pred_fallthru
      _
    // Predicated region
    $region14: #{two_layer_element_multiply.2} parent=1 // pred_check
      _
    $region15: #{two_layer_element_multiply.2} parent=1 // pred_check_branch
      %39 = sbr.rel (0) target = $region17
    $region16: #{two_layer_element_multiply.2} parent=1 // pred_region
      %41 = vsyncadd [#allocation5], 0
      %s42 = sshll.u32 %s3, 4
      %s43 = int_to_ptr.hbm [resolvable:$true] %s42
      %s44 = sshll.u32 [#allocation6], 4
      %s45 = int_to_ptr.vmem [resolvable:$true] %s44
      %50 = dma.hbm_to_vmem [thread:$0]  %s43, 2048, %s45, [#allocation5], 128, 128, 8
    $region17: #{two_layer_element_multiply.2} parent=1 // pred_fallthru
      _
    // Predicated region
    $region18: #{two_layer_element_multiply.2} parent=1 // pred_check
      _
    $region19: #{two_layer_element_multiply.2} parent=1 // pred_check_branch
      %52 = sbr.rel (0) target = $region21
    $region20: #{two_layer_element_multiply.2} parent=1 // pred_region
      _
    $region21: #{two_layer_element_multiply.2} parent=1 // pred_fallthru
      _
    // Predicated region
    $region22: #{two_layer_element_multiply.2} parent=1 // pred_check
      _
    $region23: #{two_layer_element_multiply.2} parent=1 // pred_check_branch
      %54 = sbr.rel (0) target = $region25
    $region24: #{two_layer_element_multiply.2} parent=1 // pred_region
      %56 = dma.done [#allocation3], 64
    $region25: #{two_layer_element_multiply.2} parent=1 // pred_fallthru
      _
    // Predicated region
    $region26: #{two_layer_element_multiply.2} parent=1 // pred_check
      _
    $region27: #{two_layer_element_multiply.2} parent=1 // pred_check_branch
      %58 = sbr.rel (0) target = $region29
    $region28: #{two_layer_element_multiply.2} parent=1 // pred_region
      %60 = dma.done [#allocation5], 768
    $region29: #{two_layer_element_multiply.2} parent=1 // pred_fallthru
      _
    // Predicated region
    $region30: #{two_layer_element_multiply.2} parent=1 // pred_check
      _
    $region31: #{two_layer_element_multiply.2} parent=1 // pred_check_branch
      %62 = sbr.rel (0) target = $region33
    $region32: #{two_layer_element_multiply.2} parent=1 // pred_region
      %64 = dma.done [#allocation5], 2048
    $region33: #{two_layer_element_multiply.2} parent=1 // pred_fallthru
      _
    %v65 = vld [vmem:[#allocation2] sm:$0xf]
    %v66 = vld [vmem:[#allocation4] sm:$0xff]
    %v67 = vld [vmem:[#allocation4 + $0x8] sm:$0xff]
    %v68 = vld [vmem:[#allocation4 + $0x10] sm:$0xff]
    %v69 = vld [vmem:[#allocation4 + $0x18] sm:$0xff]
    %v70 = vld [vmem:[#allocation4 + $0x20] sm:$0xff]
    %v71 = vld [vmem:[#allocation4 + $0x28] sm:$0xff]
    %v72 = vld [vmem:[%s2] sm:$0x1]
    %v74 = vperm.slane %v72, 0
    %vm76 = vcmask 392192
    %v78 = vsel %vm76, %v65, 0
    %80 = vmatpush.msra.mxu0 0.0
    %81 = vmatpush.msra.mxu0 0.0
    %82 = vmatpush.msra.mxu0 0.0
    %83 = vmatpush.msra.mxu0 0.0
    %84 = vmatpush.msra.mxu0 0.0
    %85 = vmatpush.msra.mxu0 0.0
    %86 = vmatpush.msra.mxu0 0.0
    %87 = vmatpush.msra.mxu0 0.0
    %88 = vmatpush.msra.mxu0 0.0
    %89 = vmatpush.msra.mxu0 0.0
    %90 = vmatpush.msra.mxu0 %v71
    %91 = vmatpush.msra.mxu0 %v70
    %92 = vmatpush.msra.mxu0 %v69
    %93 = vmatpush.msra.mxu0 %v68
    %94 = vmatpush.msra.mxu0 %v67
    %95 = vmatpush.msra.mxu0 %v66
    %96 = vmatmul.f32.gmra.mxu0 %v78
    %v97 = vpop.f32.mrf.mxu0
    %v98 = vadd.f32 %v74, %v97
    %99 = vdwg.mxu0
    %v100 = vmax.f32 %v98, 0.0
    %v101 = vld [vmem:[#allocation6] sm:$0xff]
    %v102 = vld [vmem:[#allocation6 + $0x8] sm:$0xff]
    %v103 = vld [vmem:[#allocation6 + $0x10] sm:$0xff]
    %v104 = vld [vmem:[#allocation6 + $0x18] sm:$0xff]
    %v105 = vld [vmem:[#allocation6 + $0x20] sm:$0xff]
    %v106 = vld [vmem:[#allocation6 + $0x28] sm:$0xff]
    %v107 = vld [vmem:[#allocation6 + $0x30] sm:$0xff]
    %v108 = vld [vmem:[#allocation6 + $0x38] sm:$0xff]
    %v109 = vld [vmem:[#allocation6 + $0x40] sm:$0xff]
    %v110 = vld [vmem:[#allocation6 + $0x48] sm:$0xff]
    %v111 = vld [vmem:[#allocation6 + $0x50] sm:$0xff]
    %v112 = vld [vmem:[#allocation6 + $0x58] sm:$0xff]
    %v113 = vld [vmem:[#allocation6 + $0x60] sm:$0xff]
    %v114 = vld [vmem:[#allocation6 + $0x68] sm:$0xff]
    %v115 = vld [vmem:[#allocation6 + $0x70] sm:$0xff]
    %v116 = vld [vmem:[#allocation6 + $0x78] sm:$0xff]
    %v117 = vld [vmem:[%s4] sm:$0x1]
    %v119 = vperm.slane %v117, 0
    %121 = vmatpush.msra.mxu0 %v116
    %122 = vmatpush.msra.mxu0 %v115
    %123 = vmatpush.msra.mxu0 %v114
    %124 = vmatpush.msra.mxu0 %v113
    %125 = vmatpush.msra.mxu0 %v112
    %126 = vmatpush.msra.mxu0 %v111
    %127 = vmatpush.msra.mxu0 %v110
    %128 = vmatpush.msra.mxu0 %v109
    %129 = vmatpush.msra.mxu0 %v108
    %130 = vmatpush.msra.mxu0 %v107
    %131 = vmatpush.msra.mxu0 %v106
    %132 = vmatpush.msra.mxu0 %v105
    %133 = vmatpush.msra.mxu0 %v104
    %134 = vmatpush.msra.mxu0 %v103
    %135 = vmatpush.msra.mxu0 %v102
    %136 = vmatpush.msra.mxu0 %v101
    %137 = vmatmul.f32.gmra.mxu0 %v100
    %v138 = vpop.f32.mrf.mxu0
    %v139 = vadd.f32 %v119, %v138
    %140 = vdwg.mxu0
    %v141 = vmax.f32 %v139, 0.0
    %142 = vst [vmem:[%s5] sm:$0xf] %v141
    // Predicated region
    $region34: #{two_layer_element_multiply.2} parent=1 // pred_check
      _
    $region35: #{two_layer_element_multiply.2} parent=1 // pred_check_branch
      %144 = sbr.rel (0) target = $region37
    $region36: #{two_layer_element_multiply.2} parent=1 // pred_region
      _
    $region37: #{two_layer_element_multiply.2} parent=1 // pred_fallthru
      _
    // Predicated region
    $region38: #{two_layer_element_multiply.2} parent=1 // pred_check
      _
    $region39: #{two_layer_element_multiply.2} parent=1 // pred_check_branch
      %146 = sbr.rel (0) target = $region41
    $region40: #{two_layer_element_multiply.2} parent=1 // pred_region
      _
    $region41: #{two_layer_element_multiply.2} parent=1 // pred_fallthru
      _
    %147 = vsyncpa [#allocation3], 1
    %148 = vsyncpa [#allocation5], 1

</llo_original>
